<compile_context>
chip_gen: v5e
topology: v5e:2x2
jax: 0.10.0
libtpu: 0.0.40
codegen_flags: <defaults>
</compile_context>

<pallas_src>
import jax
import jax.numpy as jnp
import numpy as np
from jax.experimental import pallas as pl
from jax.experimental.pallas import tpu as pltpu

LANE = 128          # TPU vreg lane width (last dim)
SUBLANE_BF16 = 16   # bf16 sublane packing (second-to-last dim)


def _round_up(v, m):
    return (v + m - 1) // m * m


def _pad2d(a, rows, cols):
    r, c = a.shape
    return jnp.pad(a, ((0, rows - r), (0, cols - c)))


def gcn_kernel(x_ref, adj_ref, w_ref, b_ref, o_ref):
    """Fused 2-layer GCN forward.

    x arrives unpadded (Np, F) f32 and is cast to bf16 in-kernel; adjacency and
    the packed weights are bf16; every jnp.dot runs on the MXU with f32
    accumulation; bias + ReLU epilogues stay in f32 (v5e has no bf16 VPU).
    """
    f = x_ref.shape[1]
    adj = adj_ref[...]                                    # (Np, Np) bf16, reused by both layers

    # --- layer 1:  relu( A_hat @ (X @ W1) + b1 ) ---
    # NOTE: association is intentionally (X @ W1) first, then A_hat @ (XW1):
    # with F, H << N this keeps the adjacency matmul at O(N^2 * H), not O(N^3).
    x_bf = x_ref[...].astype(jnp.bfloat16)                # in-kernel cast (no per-call HLO)
    w1 = w_ref[0, :f, :]                                  # (F, 128) bf16, static slice
    xw = jnp.dot(x_bf, w1, preferred_element_type=jnp.float32)          # (Np, 128) f32
    h = jnp.dot(adj, xw.astype(jnp.bfloat16),
                preferred_element_type=jnp.float32)                      # (Np, 128) f32
    h = jnp.maximum(h + b_ref[0:1, :], 0.0)               # f32 epilogue

    # --- layer 2:  A_hat @ (H @ W2) + b2 ---
    hw = jnp.dot(h.astype(jnp.bfloat16), w_ref[1],
                 preferred_element_type=jnp.float32)                     # (Np, 128) f32
    out = jnp.dot(adj, hw.astype(jnp.bfloat16),
                  preferred_element_type=jnp.float32)                    # (Np, 128) f32
    # Lane-dense store: last dim is a multiple of 128 -> unmasked vst.
    o_ref[...] = (out + b_ref[1:2, :]).astype(o_ref.dtype)


def make_conv_gcn_forward(adj_norm, w1, b1, w2, b2):
    """One-time prep of all static operands; returns a jitted forward(x).

    Per-call path: (optional row pad of x, skipped when N % 16 == 0)
    -> one pallas_call -> output slice.
    """
    n = adj_norm.shape[0]
    f, h_dim = w1.shape
    c_dim = w2.shape[1]
    n_pad = _round_up(n, SUBLANE_BF16)   # bf16 sublane packing (16), not 8

    # ---- static operands: padded + cast ONCE, outside the per-call path ----
    adj_p = _pad2d(jnp.asarray(adj_norm, jnp.float32).astype(jnp.bfloat16),
                   n_pad, n_pad)                                           # (Np, Np) bf16
    w_p = jnp.stack([
        _pad2d(jnp.asarray(w1, jnp.float32).astype(jnp.bfloat16), LANE, LANE),
        _pad2d(jnp.asarray(w2, jnp.float32).astype(jnp.bfloat16), LANE, LANE),
    ])                                                                     # (2, 128, 128) bf16
    b_p = jnp.stack([
        jnp.pad(jnp.asarray(b1, jnp.float32).reshape(-1), (0, LANE - h_dim)),
        jnp.pad(jnp.asarray(b2, jnp.float32).reshape(-1), (0, LANE - c_dim)),
    ])                                                                     # (2, 128) f32

    # Advisory cost estimate from the REAL (unpadded) dims.
    flops = 2 * (n * f * h_dim         # X @ W1
                 + n * n * h_dim       # A_hat @ XW1
                 + n * h_dim * c_dim   # H @ W2
                 + n * n * c_dim)      # A_hat @ HW2
    bytes_accessed = (4 * n * f                         # x (f32 in)
                      + 2 * n * n                       # adjacency (bf16)
                      + 2 * (f * h_dim + h_dim * c_dim) # weights (bf16)
                      + 4 * (h_dim + c_dim)             # biases (f32)
                      + 4 * n * c_dim)                  # output (f32)

    vmem = pl.BlockSpec(memory_space=pltpu.MemorySpace.VMEM)
    kernel_call = pl.pallas_call(
        gcn_kernel,
        out_shape=jax.ShapeDtypeStruct((n_pad, LANE), jnp.float32),
        in_specs=[vmem] * 4,
        out_specs=vmem,
        cost_estimate=pl.CostEstimate(flops=int(flops),
                                      transcendentals=0,
                                      bytes_accessed=int(bytes_accessed)),
        compiler_params=pltpu.CompilerParams(vmem_limit_bytes=32 * 1024 * 1024),
    )

    @jax.jit
    def forward(x):
        # Only per-call work besides the kernel itself; the row pad is elided
        # at trace time (static-shape Python check) when N is 16-aligned.
        if x.shape[0] != n_pad:
            x = jnp.pad(x, ((0, n_pad - x.shape[0]), (0, 0)))
        out_p = kernel_call(x, adj_p, w_p, b_p)
        return out_p[:n, :c_dim]

    return forward


def build_normalized_adjacency(num_nodes, edges):
    """Symmetric normalization A_hat = D^{-1/2} A D^{-1/2} (DGL norm='both')."""
    a = np.zeros((num_nodes, num_nodes), dtype=np.float32)
    for (u, v) in edges:
        a[u, v] = 1.0
        a[v, u] = 1.0  # undirected graph -> edges in both directions
    deg = a.sum(axis=1)
    d_inv_sqrt = 1.0 / np.sqrt(np.maximum(deg, 1e-12))
    a_hat = (d_inv_sqrt[:, None] * a) * d_inv_sqrt[None, :]
    return jnp.asarray(a_hat, dtype=jnp.float32)


def reference_forward_f32(adj_norm, x, w1, b1, w2, b2):
    """Exact module semantics in f32 (what the PyTorch module computes)."""
    h = jnp.maximum(adj_norm @ (x @ w1) + b1, 0.0)
    return adj_norm @ (h @ w2) + b2


def reference_forward_bf16(adj_norm, x, w1, b1, w2, b2):
    """Reference that mimics the kernel's bf16-input / f32-accumulate numerics."""
    bf = lambda a: a.astype(jnp.bfloat16)
    xw = jnp.dot(bf(x), bf(w1), preferred_element_type=jnp.float32)
    h = jnp.dot(bf(adj_norm), bf(xw), preferred_element_type=jnp.float32)
    h = jnp.maximum(h + b1, 0.0)
    hw = jnp.dot(bf(h), bf(w2), preferred_element_type=jnp.float32)
    return jnp.dot(bf(adj_norm), bf(hw), preferred_element_type=jnp.float32) + b2


if __name__ == "__main__":
    # --- shapes implied by ConvGCN(in_feats, hidden_size, num_classes) ---
    num_nodes = 16
    in_feats = 8
    hidden_size = 32
    num_classes = 4

    # deterministic small graph: ring + a few chords (every node has degree >= 2)
    edges = [(i, (i + 1) % num_nodes) for i in range(num_nodes)]
    edges += [(0, 8), (2, 10), (4, 12), (6, 14), (1, 5), (9, 13)]
    adj_norm = build_normalized_adjacency(num_nodes, edges)

    # deterministic parameter / input init (Glorot-style scaling)
    key = jax.random.PRNGKey(0)
    kx, k1, k2, kb1, kb2 = jax.random.split(key, 5)
    x = jax.random.normal(kx, (num_nodes, in_feats), dtype=jnp.float32)
    w1 = jax.random.normal(k1, (in_feats, hidden_size), dtype=jnp.float32) * (
        1.0 / np.sqrt(in_feats)
    )
    b1 = jax.random.normal(kb1, (1, hidden_size), dtype=jnp.float32) * 0.1
    w2 = jax.random.normal(k2, (hidden_size, num_classes), dtype=jnp.float32) * (
        1.0 / np.sqrt(hidden_size)
    )
    b2 = jax.random.normal(kb2, (1, num_classes), dtype=jnp.float32) * 0.1

    # One-time static prep; the returned jitted forward touches only x per call.
    conv_gcn_forward = make_conv_gcn_forward(adj_norm, w1, b1, w2, b2)

    out = conv_gcn_forward(x)
    out = jax.block_until_ready(out)
    out_np = np.asarray(out)

    # 1) Tight check against a reference that uses the same bf16/f32 numerics.
    ref_bf16 = np.asarray(reference_forward_bf16(adj_norm, x, w1, b1, w2, b2))
    np.testing.assert_allclose(out_np, ref_bf16, rtol=1e-3, atol=1e-3)

    # 2) Loose check against the exact f32 module semantics (bf16 MXU inputs).
    ref_f32 = np.asarray(reference_forward_f32(adj_norm, x, w1, b1, w2, b2))
    np.testing.assert_allclose(out_np, ref_f32, rtol=3e-2, atol=3e-2)

    print("KERNEL_OK")
</pallas_src>

<mosaic_0001>
module attributes {stable_mosaic.version = 11 : i64} {
  func.func @gcn_kernel(%arg0: memref<16x8xf32, #tpu.memory_space<vmem>>, %arg1: memref<16x16xbf16, #tpu.memory_space<vmem>>, %arg2: memref<2x128x128xbf16, #tpu.memory_space<vmem>>, %arg3: memref<2x128xf32, #tpu.memory_space<vmem>>, %arg4: memref<16x128xf32, #tpu.memory_space<vmem>>) attributes {dimension_semantics = [], scalar_prefetch = 0 : i64, scratch_operands = 0 : i64, tpu.core_type = #tpu.core_type<tc>} {
    %c0 = arith.constant 0 : index
    %c0_0 = arith.constant 0 : index
    %0 = vector.load %arg1[%c0, %c0_0] : memref<16x16xbf16, #tpu.memory_space<vmem>>, vector<16x16xbf16>
    %c0_1 = arith.constant 0 : index
    %c0_2 = arith.constant 0 : index
    %1 = vector.load %arg0[%c0_1, %c0_2] : memref<16x8xf32, #tpu.memory_space<vmem>>, vector<16x8xf32>
    %2 = arith.truncf %1 : vector<16x8xf32> to vector<16x8xbf16>
    %c0_3 = arith.constant 0 : index
    %c0_4 = arith.constant 0 : index
    %c0_5 = arith.constant 0 : index
    %3 = vector.load %arg2[%c0_3, %c0_4, %c0_5] : memref<2x128x128xbf16, #tpu.memory_space<vmem>>, vector<1x8x128xbf16>
    %4 = vector.shape_cast %3 : vector<1x8x128xbf16> to vector<8x128xbf16>
    %cst = arith.constant dense<0.000000e+00> : vector<16x128xf32>
    %5 = tpu.matmul %2, %4, %cst {dimension_numbers = #tpu.dot_dimension_numbers<[1], [0], [0], [1], [0, 0, 1, 1], [], []>} : vector<16x8xbf16>, vector<8x128xbf16>, vector<16x128xf32> -> vector<16x128xf32>
    %6 = arith.truncf %5 : vector<16x128xf32> to vector<16x128xbf16>
    %cst_6 = arith.constant dense<0.000000e+00> : vector<16x128xf32>
    %7 = tpu.matmul %0, %6, %cst_6 {dimension_numbers = #tpu.dot_dimension_numbers<[1], [0], [0], [1], [0, 0, 1, 1], [], []>} : vector<16x16xbf16>, vector<16x128xbf16>, vector<16x128xf32> -> vector<16x128xf32>
    %c0_7 = arith.constant 0 : index
    %c0_8 = arith.constant 0 : index
    %8 = vector.load %arg3[%c0_7, %c0_8] : memref<2x128xf32, #tpu.memory_space<vmem>>, vector<1x128xf32>
    %9 = vector.broadcast %8 : vector<1x128xf32> to vector<16x128xf32>
    %10 = arith.addf %7, %9 : vector<16x128xf32>
    %cst_9 = arith.constant 0.000000e+00 : f32
    %11 = vector.broadcast %cst_9 : f32 to vector<16x128xf32>
    %12 = arith.maximumf %10, %11 : vector<16x128xf32>
    %13 = arith.truncf %12 : vector<16x128xf32> to vector<16x128xbf16>
    %c1 = arith.constant 1 : index
    %c0_10 = arith.constant 0 : index
    %c0_11 = arith.constant 0 : index
    %14 = vector.load %arg2[%c1, %c0_10, %c0_11] : memref<2x128x128xbf16, #tpu.memory_space<vmem>>, vector<1x128x128xbf16>
    %15 = vector.shape_cast %14 : vector<1x128x128xbf16> to vector<128x128xbf16>
    %cst_12 = arith.constant dense<0.000000e+00> : vector<16x128xf32>
    %16 = tpu.matmul %13, %15, %cst_12 {dimension_numbers = #tpu.dot_dimension_numbers<[1], [0], [0], [1], [0, 0, 1, 1], [], []>} : vector<16x128xbf16>, vector<128x128xbf16>, vector<16x128xf32> -> vector<16x128xf32>
    %17 = arith.truncf %16 : vector<16x128xf32> to vector<16x128xbf16>
    %cst_13 = arith.constant dense<0.000000e+00> : vector<16x128xf32>
    %18 = tpu.matmul %0, %17, %cst_13 {dimension_numbers = #tpu.dot_dimension_numbers<[1], [0], [0], [1], [0, 0, 1, 1], [], []>} : vector<16x16xbf16>, vector<16x128xbf16>, vector<16x128xf32> -> vector<16x128xf32>
    %c1_14 = arith.constant 1 : index
    %c0_15 = arith.constant 0 : index
    %19 = vector.load %arg3[%c1_14, %c0_15] : memref<2x128xf32, #tpu.memory_space<vmem>>, vector<1x128xf32>
    %20 = vector.broadcast %19 : vector<1x128xf32> to vector<16x128xf32>
    %21 = arith.addf %18, %20 : vector<16x128xf32>
    %c0_16 = arith.constant 0 : index
    %c0_17 = arith.constant 0 : index
    %22 = vector.load %arg4[%c0_16, %c0_17] : memref<16x128xf32, #tpu.memory_space<vmem>>, vector<16x128xf32>
    tpu.vector_store %arg4[%c0_16, %c0_17], %21 {strides = array<i32>} : memref<16x128xf32, #tpu.memory_space<vmem>>, vector<16x128xf32>,
    return
  }
}

</mosaic_0001>

<llo_original>
// kernel: forward.1
$region0: #{forward.1}
  #allocation0 [shape = 'u32[]', space=smem, size = 0x4, offset = 0x4, fixed_abs, tag = 'smem constant byte address 0x4 - core index']
  #allocation1 [shape = 'u32[72,128]{1,0:T(1,128)}', space=vmem, size = 0x9000, scoped, tag = 'internal scratch']
  %s0 = inlined_call_operand.vmem [shape: f32[16,8], index: 0, kind: input, shape index: {}]
  %s1 = inlined_call_operand.vmem [shape: bf16[16,16], index: 1, kind: input, shape index: {}]
  %s2 = inlined_call_operand.hbm [shape: bf16[2,128,128], index: 2, kind: input, shape index: {}]
  %s3 = inlined_call_operand.vmem [shape: f32[2,128], index: 3, kind: input, shape index: {}]
  %s4 = inlined_call_operand.vmem [shape: f32[16,128], index: 4, kind: output, shape index: {}]
  %s5 = sld [smem:[#allocation0]]
  $region30: #{forward.1} parent=0
    _
  %s7 = ssub.s32 1, %s5
  %s8 = scalar_select 0, %s7, %s5
  $region1: #{forward.1} parent=0
    #allocation2 [shape = 'u8[65536]{0}', space=vmem, size = 0x10000, scoped, tag = 'input window, operand 2, single buffered']
    #allocation3 [shape = 's32[1]{0}', space=sflag, size = 0x4, scoped, tag = 'scoped memory for forward.1']
    %9 = vsyncpa [#allocation3], 0
    // Predicated region
    $region2: #{forward.1} parent=1 // pred_check
      _
    $region3: #{forward.1} parent=1 // pred_check_branch
      %11 = sbr.rel (0) target = $region5
    $region4: #{forward.1} parent=1 // pred_region
      _
    $region5: #{forward.1} parent=1 // pred_fallthru
      _
    // Predicated region
    $region6: #{forward.1} parent=1 // pred_check
      _
    $region7: #{forward.1} parent=1 // pred_check_branch
      %13 = sbr.rel (0) target = $region9
    $region8: #{forward.1} parent=1 // pred_region
      _
    $region9: #{forward.1} parent=1 // pred_fallthru
      _
    // Predicated region
    $region10: #{forward.1} parent=1 // pred_check
      _
    $region11: #{forward.1} parent=1 // pred_check_branch
      %15 = sbr.rel (0) target = $region13
    $region12: #{forward.1} parent=1 // pred_region
      %17 = vsyncadd [#allocation3], 0
      %s18 = sshll.u32 %s2, 4
      %s19 = int_to_ptr.hbm [resolvable:$true] %s18
      %s20 = sshll.u32 [#allocation2], 4
      %s21 = int_to_ptr.vmem [resolvable:$true] %s20
      %26 = dma.hbm_to_vmem [thread:$0]  %s19, 2048, %s21, [#allocation3], 64, 64, 4
    $region13: #{forward.1} parent=1 // pred_fallthru
      _
    // Predicated region
    $region14: #{forward.1} parent=1 // pred_check
      _
    $region15: #{forward.1} parent=1 // pred_check_branch
      %28 = sbr.rel (0) target = $region17
    $region16: #{forward.1} parent=1 // pred_region
      _
    $region17: #{forward.1} parent=1 // pred_fallthru
      _
    // Predicated region
    $region18: #{forward.1} parent=1 // pred_check
      _
    $region19: #{forward.1} parent=1 // pred_check_branch
      %30 = sbr.rel (0) target = $region21
    $region20: #{forward.1} parent=1 // pred_region
      %32 = dma.done [#allocation3], 2048
    $region21: #{forward.1} parent=1 // pred_fallthru
      _
    %v34 = vld [vmem:[%s1] sm:$0xf]
    %v35 = vld [vmem:[%s1 + $0x4] sm:$0xf]
    %v36 = vld [vmem:[%s0] sm:$0xff]
    %v37 = vld [vmem:[%s0 + $0x8] sm:$0xff]
    %v38 = vpack.c.bf16 %v37, %v36
    %v39 = vld [vmem:[#allocation2] sm:$0xf]
    %vm40 = vcmask 64512
    %v42 = vsel %vm40, %v38, 0
    %vm44 = vcmask 1043456
    %v46 = vsel %vm44, %v39, 0
    %48 = vmatpush.bf16.msra.mxu0 0
    %49 = vmatpush.bf16.msra.mxu0 0
    %50 = vmatpush.bf16.msra.mxu0 0
    %51 = vmatpush.bf16.msra.mxu0 0
    %52 = vmatpush.bf16.msra.mxu0 0
    %53 = vmatpush.bf16.msra.mxu0 0
    %54 = vmatpush.bf16.msra.mxu0 0
    %55 = vmatpush.bf16.msra.mxu0 %v46
    %56 = vmatmul.bf16.gmra.mxu0 %v42
    %v57 = vpop.f32.mrf.mxu0
    %v58 = vadd.f32 0.0, %v57
    %v59 = vpop.f32.mrf.mxu0
    %v60 = vadd.f32 0.0, %v59
    %61 = vdwg.mxu0
    %v62 = vpack.c.bf16 %v60, %v58
    %v63 = vld [vmem:[%s3] sm:$0x1]
    %v64 = vperm.slane %v63, 0
    %v67 = vunpack.c.l.b16 %v34
    %v68 = vunpack.c.l.b16 %v35
    %v69 = vpack.c.b16 %v68, %v67
    %vm70 = vcmask 130048
    %v72 = vsel %vm70, %v69, 0
    %74 = vmatpush.bf16.msra.mxu0 0
    %75 = vmatpush.bf16.msra.mxu0 0
    %76 = vmatpush.bf16.msra.mxu0 0
    %77 = vmatpush.bf16.msra.mxu0 0
    %78 = vmatpush.bf16.msra.mxu0 0
    %79 = vmatpush.bf16.msra.mxu0 0
    %80 = vmatpush.bf16.msra.mxu0 0
    %81 = vmatpush.bf16.msra.mxu0 %v62
    %82 = vmatmul.bf16.gmra.mxu0 %v72
    %v83 = vpop.f32.mrf.mxu0
    %v84 = vadd.f32 %v64, %v83
    %v85 = vpop.f32.mrf.mxu0
    %v86 = vadd.f32 %v64, %v85
    %87 = vdwg.mxu0
    %v88 = vmax.f32 %v84, 0.0
    %v89 = vmax.f32 %v86, 0.0
    %v90 = vpack.c.bf16 %v89, %v88
    %s91 = scalar_lea.vmem [#allocation2], 64
    %v92 = vld [vmem:[%s91] sm:$0xf]
    %v93 = vld [vmem:[%s91 + $0x4] sm:$0xf]
    %v94 = vld [vmem:[%s91 + $0x8] sm:$0xf]
    %v95 = vld [vmem:[%s91 + $0xc] sm:$0xf]
    %v96 = vld [vmem:[%s91 + $0x10] sm:$0xf]
    %v97 = vld [vmem:[%s91 + $0x14] sm:$0xf]
    %v98 = vld [vmem:[%s91 + $0x18] sm:$0xf]
    %v99 = vld [vmem:[%s91 + $0x1c] sm:$0xf]
    %v100 = vld [vmem:[%s91 + $0x20] sm:$0xf]
    %v101 = vld [vmem:[%s91 + $0x24] sm:$0xf]
    %v102 = vld [vmem:[%s91 + $0x28] sm:$0xf]
    %v103 = vld [vmem:[%s91 + $0x2c] sm:$0xf]
    %v104 = vld [vmem:[%s91 + $0x30] sm:$0xf]
    %v105 = vld [vmem:[%s91 + $0x34] sm:$0xf]
    %v106 = vld [vmem:[%s91 + $0x38] sm:$0xf]
    %v107 = vld [vmem:[%s91 + $0x3c] sm:$0xf]
    %v124 = vunpack.c.l.b16 %v92
    %v125 = vunpack.c.l.b16 %v93
    %v126 = vunpack.c.l.b16 %v94
    %v127 = vunpack.c.l.b16 %v95
    %v128 = vunpack.c.l.b16 %v96
    %v129 = vunpack.c.l.b16 %v97
    %v130 = vunpack.c.l.b16 %v98
    %v131 = vunpack.c.l.b16 %v99
    %v132 = vunpack.c.l.b16 %v100
    %v133 = vunpack.c.l.b16 %v101
    %v134 = vunpack.c.l.b16 %v102
    %v135 = vunpack.c.l.b16 %v103
    %v136 = vunpack.c.l.b16 %v104
    %v137 = vunpack.c.l.b16 %v105
    %v138 = vunpack.c.l.b16 %v106
    %v139 = vunpack.c.l.b16 %v107
    %v140 = vpack.c.b16 %v125, %v124
    %v141 = vpack.c.b16 %v127, %v126
    %v142 = vpack.c.b16 %v129, %v128
    %v143 = vpack.c.b16 %v131, %v130
    %v144 = vpack.c.b16 %v133, %v132
    %v145 = vpack.c.b16 %v135, %v134
    %v146 = vpack.c.b16 %v137, %v136
    %v147 = vpack.c.b16 %v139, %v138
    %156 = vmatpush.bf16.msra.mxu0 %v147
    %157 = vmatpush.bf16.msra.mxu0 %v146
    %158 = vmatpush.bf16.msra.mxu0 %v145
    %159 = vmatpush.bf16.msra.mxu0 %v144
    %160 = vmatpush.bf16.msra.mxu0 %v143
    %161 = vmatpush.bf16.msra.mxu0 %v142
    %162 = vmatpush.bf16.msra.mxu0 %v141
    %163 = vmatpush.bf16.msra.mxu0 %v140
    %164 = vmatmul.bf16.gmra.mxu0 %v90
    %v165 = vpop.f32.mrf.mxu0
    %v166 = vadd.f32 0.0, %v165
    %v167 = vpop.f32.mrf.mxu0
    %v168 = vadd.f32 0.0, %v167
    %169 = vdwg.mxu0
    %v170 = vpack.c.bf16 %v168, %v166
    %v171 = vld [vmem:[%s3 + $0x1] sm:$0x1]
    %v172 = vperm.slane %v171, 0
    %173 = vmatpush.bf16.msra.mxu0 0
    %174 = vmatpush.bf16.msra.mxu0 0
    %175 = vmatpush.bf16.msra.mxu0 0
    %176 = vmatpush.bf16.msra.mxu0 0
    %177 = vmatpush.bf16.msra.mxu0 0
    %178 = vmatpush.bf16.msra.mxu0 0
    %179 = vmatpush.bf16.msra.mxu0 0
    %180 = vmatpush.bf16.msra.mxu0 %v170
    %181 = vmatmul.bf16.gmra.mxu0 %v72
    %v182 = vpop.f32.mrf.mxu0
    %v183 = vadd.f32 %v172, %v182
    %v184 = vpop.f32.mrf.mxu0
    %v185 = vadd.f32 %v172, %v184
    %186 = vdwg.mxu0
    %187 = vst [vmem:[%s4] sm:$0xff] %v183
    %188 = vst [vmem:[%s4 + $0x8] sm:$0xff] %v185
    // Predicated region
    $region22: #{forward.1} parent=1 // pred_check
      _
    $region23: #{forward.1} parent=1 // pred_check_branch
      %190 = sbr.rel (0) target = $region25
    $region24: #{forward.1} parent=1 // pred_region
      _
    $region25: #{forward.1} parent=1 // pred_fallthru
      _
    // Predicated region
    $region26: #{forward.1} parent=1 // pred_check
      _
    $region27: #{forward.1} parent=1 // pred_check_branch
      %192 = sbr.rel (0) target = $region29
    $region28: #{forward.1} parent=1 // pred_region
      _
    $region29: #{forward.1} parent=1 // pred_fallthru
      _
    %193 = vsyncpa [#allocation3], 1

</llo_original>
